<compile_context>
chip_gen: v7x
topology: tpu7x:2x2x1
jax: 0.10.0
libtpu: 0.0.40
codegen_flags: <defaults>
</compile_context>

<pallas_src>
import functools

import jax
import jax.numpy as jnp
from jax import lax
from jax.experimental import pallas as pl
from jax.experimental.pallas import tpu as pltpu

TEMPERATURE = 0.1
INV_T = 1.0 / TEMPERATURE
# torch.nn.CosineSimilarity clamps ||zi||*||zj|| at eps=1e-8; per-row
# normalization clamps each norm at sqrt(1e-8)=1e-4 (identical unless an
# embedding is numerically ~zero).
NORM_FLOOR = 1e-4
NEG_INF = -1e30


def _round_up(x, m):
    return (x + m - 1) // m * m


def nt_xent_lse_kernel(z_row_ref, z_col_ref, lse_ref, m_sc, l_sc, *,
                       batch, half_pad, mask_pad_cols):
    """One (row-tile i, column-tile k) step of the tiled online logsumexp.

    Operands arrive pre-normalized and pre-scaled by sqrt(1/T) in bf16, so the
    logits tile is a single MXU matmul with f32 accumulation.  Masking work is
    gated to the tiles that actually need it.
    """
    i = pl.program_id(0)                 # row tile      ("parallel")
    k = pl.program_id(1)                 # column tile   ("arbitrary")
    num_k = pl.num_programs(1)

    tm = z_row_ref.shape[0]
    tk = z_col_ref.shape[0]

    @pl.when(k == 0)
    def _init():
        m_sc[...] = jnp.full(m_sc.shape, NEG_INF, dtype=jnp.float32)
        l_sc[...] = jnp.zeros(l_sc.shape, dtype=jnp.float32)

    # Logits tile on the MXU: bf16 operands, f32 accumulate, transpose fused.
    s = lax.dot_general(z_row_ref[...], z_col_ref[...],
                        dimension_numbers=(((1,), (1,)), ((), ())),
                        preferred_element_type=jnp.float32)       # (tm, tk)

    row0 = i * tm
    col0 = k * tk

    # Scalar gates: does this tile touch the diagonal / padded columns?
    diag_here = (col0 <= row0) & (row0 < col0 + tk)
    needs_mask = diag_here
    if mask_pad_cols:
        # each column tile lies entirely within one batch half (tk | half_pad)
        col_local0 = col0 - jnp.where(col0 >= half_pad, half_pad, 0)
        pad_here = (col_local0 + tk) > batch
        needs_mask = needs_mask | pad_here

    def _online_update(s_val):
        m_prev = m_sc[...]
        m_new = jnp.maximum(m_prev, jnp.max(s_val, axis=-1, keepdims=True))
        alpha = jnp.exp(m_prev - m_new)
        l_sc[...] = alpha * l_sc[...] + jnp.sum(jnp.exp(s_val - m_new),
                                                axis=-1, keepdims=True)
        m_sc[...] = m_new

    @pl.when(needs_mask)
    def _masked_update():
        # One lane-size iota + one (tm,1) sublane iota (not two full iotas).
        col_local = lax.broadcasted_iota(jnp.int32, (tm, tk), 1)
        row_local = lax.broadcasted_iota(jnp.int32, (tm, 1), 0)
        bad = col_local == (row_local + (row0 - col0))            # diagonal
        if mask_pad_cols:
            bad = bad | (col_local >= (batch - col_local0))       # padded cols
        _online_update(jnp.where(bad, NEG_INF, s))

    @pl.when(jnp.logical_not(needs_mask))
    def _fast_update():
        _online_update(s)

    @pl.when(k == num_k - 1)
    def _finalize():
        lse_ref[...] = m_sc[...] + jnp.log(l_sc[...])


def simclr_loss(mixture_features, track_features, logit_scale_m=None,
                logit_scale_t=None, mixture_features_mlp=None,
                track_features_mlp=None, *, tile_m=256, tile_k=1024):
    # logit_scale_* / *_mlp accepted for API parity with SimCLRLoss.forward;
    # NT_Xent ignores them.  world_size == 1 -> no cross-device gather.
    zi = jnp.asarray(mixture_features, jnp.float32)
    zj = jnp.asarray(track_features, jnp.float32)
    B, D = zi.shape
    N = 2 * B

    # ---- O(N*D) prep hoisted out of the kernel -----------------------------
    z = jnp.concatenate([zi, zj], axis=0)
    nrm = jnp.sqrt(jnp.sum(z * z, axis=-1, keepdims=True))
    zn = z * (1.0 / jnp.maximum(nrm, NORM_FLOOR))                  # f32, unit rows

    # positive logits (row r paired with row r +/- B), f32, O(N*D)
    pos = INV_T * jnp.sum(zn * jnp.roll(zn, B, axis=0), axis=-1)   # (N,)

    # sqrt(1/T) folded symmetrically into both matmul operands; bf16 stream.
    z_bf16 = (zn * (INV_T ** 0.5)).astype(jnp.bfloat16)

    # ---- tiling -------------------------------------------------------------
    d_pad = _round_up(D, 128)                          # lane-dense feature dim
    tm = min(tile_m, _round_up(B, 8))                  # row tile
    # Column tile = c * tm: as large as useful, but keep the double-buffered
    # bf16 column stream under ~8 MiB so it fits every generation's scoped
    # VMEM (v5e default 16 MiB, v7x physical 64 MiB) comfortably.
    c = max(tile_k // tm, 1)
    c = min(c, max((8 * 1024 * 1024) // (2 * 2 * tm * d_pad), 1))
    c = min(c, -(-B // tm))                            # no point exceeding one half
    tk = c * tm
    half_pad = _round_up(B, tk)                        # each half padded separately
    n_pad = 2 * half_pad
    num_row_tiles = n_pad // tm                        # even -> balanced megacore
    num_col_tiles = n_pad // tk

    pad_r, pad_c = half_pad - B, d_pad - D
    z_p = jnp.concatenate(
        [jnp.pad(z_bf16[:B], ((0, pad_r), (0, pad_c))),
         jnp.pad(z_bf16[B:], ((0, pad_r), (0, pad_c)))], axis=0)   # (n_pad, d_pad)

    kernel = functools.partial(nt_xent_lse_kernel, batch=B, half_pad=half_pad,
                               mask_pad_cols=(half_pad != B))

    lse = pl.pallas_call(
        kernel,
        out_shape=jax.ShapeDtypeStruct((n_pad, 1), jnp.float32),
        grid_spec=pltpu.PrefetchScalarGridSpec(
            num_scalar_prefetch=0,
            grid=(num_row_tiles, num_col_tiles),
            in_specs=[
                pl.BlockSpec((tm, d_pad), lambda i, k: (i, 0)),   # row tile
                pl.BlockSpec((tk, d_pad), lambda i, k: (k, 0)),   # column tile
            ],
            out_specs=pl.BlockSpec((tm, 1), lambda i, k: (i, 0)),
            scratch_shapes=[
                pltpu.VMEM((tm, 1), jnp.float32),   # running max
                pltpu.VMEM((tm, 1), jnp.float32),   # running sum
            ]),
        compiler_params=pltpu.CompilerParams(
            dimension_semantics=("parallel", "arbitrary"),
            vmem_limit_bytes=32 * 1024 * 1024),
    )(z_p, z_p)

    lse = lse[:, 0]
    lse_valid = jnp.concatenate([lse[:B], lse[half_pad:half_pad + B]])
    return (jnp.sum(lse_valid) - jnp.sum(pos)) / jnp.float32(N)


def simclr_loss_ref(mixture_features, track_features):
    # Pure-JAX f32 reference mirroring the PyTorch NT_Xent semantics.
    z = jnp.concatenate([mixture_features, track_features],
                        axis=0).astype(jnp.float32)
    N = z.shape[0]
    B = N // 2
    nrm = jnp.sqrt(jnp.sum(z * z, axis=-1, keepdims=True))
    zn = z * (1.0 / jnp.maximum(nrm, NORM_FLOOR))
    sim = INV_T * (zn @ zn.T)
    sim = jnp.where(jnp.eye(N, dtype=bool), NEG_INF, sim)
    m = jnp.max(sim, axis=-1, keepdims=True)
    lse = m + jnp.log(jnp.sum(jnp.exp(sim - m), axis=-1, keepdims=True))
    pos = INV_T * jnp.sum(zn * jnp.roll(zn, B, axis=0), axis=-1, keepdims=True)
    return jnp.sum(lse - pos) / N


if __name__ == "__main__":
    key = jax.random.PRNGKey(0)
    # Second config exercises the row/column padding + mask-gating paths.
    for batch, dim in ((8, 32), (12, 48)):
        key, k1, k2 = jax.random.split(key, 3)
        mixture = jax.random.normal(k1, (batch, dim), dtype=jnp.float32)
        track = jax.random.normal(k2, (batch, dim), dtype=jnp.float32)
        logit_scale_m = jnp.float32(1.0)   # unused by NT_Xent, API parity only

        loss = simclr_loss(mixture, track, logit_scale_m)
        jax.block_until_ready(loss)

        ref = simclr_loss_ref(mixture, track)
        # bf16 MXU operands -> ~0.4% relative logit error; loosened tolerance.
        assert jnp.allclose(loss, ref, rtol=2e-2, atol=2e-2), (batch, dim, loss, ref)

    print("KERNEL_OK")
</pallas_src>

<mosaic_0001>
module attributes {stable_mosaic.version = 11 : i64} {
  func.func @nt_xent_lse_kernel(%arg0: i32, %arg1: i32, %arg2: memref<8x128xbf16, #tpu.memory_space<vmem>>, %arg3: memref<8x128xbf16, #tpu.memory_space<vmem>>, %arg4: memref<8x1xf32, #tpu.memory_space<vmem>>, %arg5: memref<8x1xf32, #tpu.memory_space<vmem>>, %arg6: memref<8x1xf32, #tpu.memory_space<vmem>>) attributes {dimension_semantics = [#tpu.dimension_semantics<parallel>, #tpu.dimension_semantics<arbitrary>], iteration_bounds = array<i64: 2, 2>, scalar_prefetch = 0 : i64, scratch_operands = 2 : i64, tpu.core_type = #tpu.core_type<tc>, window_params = [{transform_indices = @transform_0, window_bounds = array<i64: 8, 128>}, {transform_indices = @transform_1, window_bounds = array<i64: 8, 128>}, {transform_indices = @transform_2, window_bounds = array<i64: 8, 1>}]} {
    %c0_i32 = arith.constant 0 : i32
    %0 = arith.cmpi eq, %arg1, %c0_i32 : i32
    %1 = arith.extui %0 : i1 to i32
    %c0_i32_0 = arith.constant 0 : i32
    %2 = arith.cmpi ne, %1, %c0_i32_0 : i32
    scf.if %2 {
      %cst_9 = arith.constant -1.000000e+30 : f32
      %20 = vector.broadcast %cst_9 : f32 to vector<8x1xf32>
      %c0_10 = arith.constant 0 : index
      %c0_11 = arith.constant 0 : index
      %21 = vector.load %arg5[%c0_10, %c0_11] : memref<8x1xf32, #tpu.memory_space<vmem>>, vector<8x1xf32>
      tpu.vector_store %arg5[%c0_10, %c0_11], %20 {strides = array<i32>} : memref<8x1xf32, #tpu.memory_space<vmem>>, vector<8x1xf32>,
      %cst_12 = arith.constant 0.000000e+00 : f32
      %22 = vector.broadcast %cst_12 : f32 to vector<8x1xf32>
      %c0_13 = arith.constant 0 : index
      %c0_14 = arith.constant 0 : index
      %23 = vector.load %arg6[%c0_13, %c0_14] : memref<8x1xf32, #tpu.memory_space<vmem>>, vector<8x1xf32>
      tpu.vector_store %arg6[%c0_13, %c0_14], %22 {strides = array<i32>} : memref<8x1xf32, #tpu.memory_space<vmem>>, vector<8x1xf32>,
    } else {
    }
    %c0 = arith.constant 0 : index
    %c0_1 = arith.constant 0 : index
    %3 = vector.load %arg2[%c0, %c0_1] : memref<8x128xbf16, #tpu.memory_space<vmem>>, vector<8x128xbf16>
    %c0_2 = arith.constant 0 : index
    %c0_3 = arith.constant 0 : index
    %4 = vector.load %arg3[%c0_2, %c0_3] : memref<8x128xbf16, #tpu.memory_space<vmem>>, vector<8x128xbf16>
    %cst = arith.constant dense<0.000000e+00> : vector<8x8xf32>
    %5 = tpu.matmul %3, %4, %cst {dimension_numbers = #tpu.dot_dimension_numbers<[1], [1], [0], [0], [0, 0, 1, 0], [], []>} : vector<8x128xbf16>, vector<8x128xbf16>, vector<8x8xf32> -> vector<8x8xf32>
    %c8_i32 = arith.constant 8 : i32
    %6 = arith.muli %arg0, %c8_i32 : i32
    %c8_i32_4 = arith.constant 8 : i32
    %7 = arith.muli %arg1, %c8_i32_4 : i32
    %8 = arith.cmpi sle, %7, %6 : i32
    %c8_i32_5 = arith.constant 8 : i32
    %9 = arith.addi %7, %c8_i32_5 : i32
    %10 = arith.cmpi slt, %6, %9 : i32
    %11 = arith.andi %8, %10 : i1
    %12 = arith.extui %11 : i1 to i32
    %c0_i32_6 = arith.constant 0 : i32
    %13 = arith.cmpi ne, %12, %c0_i32_6 : i32
    scf.if %13 {
      %20 = tpu.iota {dimensions = array<i32: 1>} : vector<8x8xi32>
      %21 = tpu.iota {dimensions = array<i32: 0>} : vector<8x1xi32>
      %22 = arith.subi %6, %7 : i32
      %23 = vector.broadcast %22 : i32 to vector<8x1xi32>
      %24 = arith.addi %21, %23 : vector<8x1xi32>
      %25 = vector.broadcast %24 : vector<8x1xi32> to vector<8x8xi32>
      %26 = arith.cmpi eq, %20, %25 : vector<8x8xi32>
      %cst_9 = arith.constant -1.000000e+30 : f32
      %27 = vector.broadcast %cst_9 : f32 to vector<8x8xf32>
      %28 = arith.select %26, %27, %5 : vector<8x8xi1>, vector<8x8xf32>
      %c0_10 = arith.constant 0 : index
      %c0_11 = arith.constant 0 : index
      %29 = vector.load %arg5[%c0_10, %c0_11] : memref<8x1xf32, #tpu.memory_space<vmem>>, vector<8x1xf32>
      %cst_12 = arith.constant dense<0xFF800000> : vector<8xf32>
      %30 = vector.multi_reduction <maximumf>, %28, %cst_12 [1] : vector<8x8xf32> to vector<8xf32>
      %31 = vector.shape_cast %30 : vector<8xf32> to vector<8x1xf32>
      %32 = arith.maximumf %29, %31 : vector<8x1xf32>
      %33 = arith.subf %29, %32 : vector<8x1xf32>
      %34 = math.exp %33 : vector<8x1xf32>
      %c0_13 = arith.constant 0 : index
      %c0_14 = arith.constant 0 : index
      %35 = vector.load %arg6[%c0_13, %c0_14] : memref<8x1xf32, #tpu.memory_space<vmem>>, vector<8x1xf32>
      %36 = arith.mulf %34, %35 : vector<8x1xf32>
      %37 = vector.broadcast %32 : vector<8x1xf32> to vector<8x8xf32>
      %38 = arith.subf %28, %37 : vector<8x8xf32>
      %39 = math.exp %38 : vector<8x8xf32>
      %cst_15 = arith.constant dense<0.000000e+00> : vector<8xf32>
      %40 = vector.multi_reduction <add>, %39, %cst_15 [1] : vector<8x8xf32> to vector<8xf32>
      %41 = vector.shape_cast %40 : vector<8xf32> to vector<8x1xf32>
      %42 = arith.addf %36, %41 : vector<8x1xf32>
      %c0_16 = arith.constant 0 : index
      %c0_17 = arith.constant 0 : index
      %43 = vector.load %arg6[%c0_16, %c0_17] : memref<8x1xf32, #tpu.memory_space<vmem>>, vector<8x1xf32>
      tpu.vector_store %arg6[%c0_16, %c0_17], %42 {strides = array<i32>} : memref<8x1xf32, #tpu.memory_space<vmem>>, vector<8x1xf32>,
      %c0_18 = arith.constant 0 : index
      %c0_19 = arith.constant 0 : index
      %44 = vector.load %arg5[%c0_18, %c0_19] : memref<8x1xf32, #tpu.memory_space<vmem>>, vector<8x1xf32>
      tpu.vector_store %arg5[%c0_18, %c0_19], %32 {strides = array<i32>} : memref<8x1xf32, #tpu.memory_space<vmem>>, vector<8x1xf32>,
    } else {
    }
    %true = arith.constant true
    %14 = arith.xori %11, %true : i1
    %15 = arith.extui %14 : i1 to i32
    %c0_i32_7 = arith.constant 0 : i32
    %16 = arith.cmpi ne, %15, %c0_i32_7 : i32
    scf.if %16 {
      %c0_9 = arith.constant 0 : index
      %c0_10 = arith.constant 0 : index
      %20 = vector.load %arg5[%c0_9, %c0_10] : memref<8x1xf32, #tpu.memory_space<vmem>>, vector<8x1xf32>
      %cst_11 = arith.constant dense<0xFF800000> : vector<8xf32>
      %21 = vector.multi_reduction <maximumf>, %5, %cst_11 [1] : vector<8x8xf32> to vector<8xf32>
      %22 = vector.shape_cast %21 : vector<8xf32> to vector<8x1xf32>
      %23 = arith.maximumf %20, %22 : vector<8x1xf32>
      %24 = arith.subf %20, %23 : vector<8x1xf32>
      %25 = math.exp %24 : vector<8x1xf32>
      %c0_12 = arith.constant 0 : index
      %c0_13 = arith.constant 0 : index
      %26 = vector.load %arg6[%c0_12, %c0_13] : memref<8x1xf32, #tpu.memory_space<vmem>>, vector<8x1xf32>
      %27 = arith.mulf %25, %26 : vector<8x1xf32>
      %28 = vector.broadcast %23 : vector<8x1xf32> to vector<8x8xf32>
      %29 = arith.subf %5, %28 : vector<8x8xf32>
      %30 = math.exp %29 : vector<8x8xf32>
      %cst_14 = arith.constant dense<0.000000e+00> : vector<8xf32>
      %31 = vector.multi_reduction <add>, %30, %cst_14 [1] : vector<8x8xf32> to vector<8xf32>
      %32 = vector.shape_cast %31 : vector<8xf32> to vector<8x1xf32>
      %33 = arith.addf %27, %32 : vector<8x1xf32>
      %c0_15 = arith.constant 0 : index
      %c0_16 = arith.constant 0 : index
      %34 = vector.load %arg6[%c0_15, %c0_16] : memref<8x1xf32, #tpu.memory_space<vmem>>, vector<8x1xf32>
      tpu.vector_store %arg6[%c0_15, %c0_16], %33 {strides = array<i32>} : memref<8x1xf32, #tpu.memory_space<vmem>>, vector<8x1xf32>,
      %c0_17 = arith.constant 0 : index
      %c0_18 = arith.constant 0 : index
      %35 = vector.load %arg5[%c0_17, %c0_18] : memref<8x1xf32, #tpu.memory_space<vmem>>, vector<8x1xf32>
      tpu.vector_store %arg5[%c0_17, %c0_18], %23 {strides = array<i32>} : memref<8x1xf32, #tpu.memory_space<vmem>>, vector<8x1xf32>,
    } else {
    }
    %c1_i32 = arith.constant 1 : i32
    %17 = arith.cmpi eq, %arg1, %c1_i32 : i32
    %18 = arith.extui %17 : i1 to i32
    %c0_i32_8 = arith.constant 0 : i32
    %19 = arith.cmpi ne, %18, %c0_i32_8 : i32
    scf.if %19 {
      %c0_9 = arith.constant 0 : index
      %c0_10 = arith.constant 0 : index
      %20 = vector.load %arg5[%c0_9, %c0_10] : memref<8x1xf32, #tpu.memory_space<vmem>>, vector<8x1xf32>
      %c0_11 = arith.constant 0 : index
      %c0_12 = arith.constant 0 : index
      %21 = vector.load %arg6[%c0_11, %c0_12] : memref<8x1xf32, #tpu.memory_space<vmem>>, vector<8x1xf32>
      %22 = math.log %21 : vector<8x1xf32>
      %23 = arith.addf %20, %22 : vector<8x1xf32>
      %c0_13 = arith.constant 0 : index
      %c0_14 = arith.constant 0 : index
      %24 = vector.load %arg4[%c0_13, %c0_14] : memref<8x1xf32, #tpu.memory_space<vmem>>, vector<8x1xf32>
      tpu.vector_store %arg4[%c0_13, %c0_14], %23 {strides = array<i32>} : memref<8x1xf32, #tpu.memory_space<vmem>>, vector<8x1xf32>,
    } else {
    }
    return
  }
  func.func @transform_0(%arg0: i32, %arg1: i32) -> (i32, i32) {
    %c0_i32 = arith.constant 0 : i32
    %c0_i32_0 = arith.constant 0 : i32
    return %arg0, %c0_i32 : i32, i32
  }
  func.func @transform_1(%arg0: i32, %arg1: i32) -> (i32, i32) {
    %c0_i32 = arith.constant 0 : i32
    %c0_i32_0 = arith.constant 0 : i32
    return %arg1, %c0_i32 : i32, i32
  }
  func.func @transform_2(%arg0: i32, %arg1: i32) -> (i32, i32) {
    %c0_i32 = arith.constant 0 : i32
    %c0_i32_0 = arith.constant 0 : i32
    return %arg0, %c0_i32 : i32, i32
  }
}

</mosaic_0001>

<llo_original>
// kernel: tpu_custom_call.1
$region0: #{tpu_custom_call.1}
  #allocation0 [shape = 'u32[]', space=smem, size = 0x4, offset = 0x4, fixed_abs, tag = 'smem constant byte address 0x4 - core index']
  #allocation1 [shape = 'u32[144,128]{1,0:T(1,128)}', space=vmem, size = 0x12000, scoped, tag = 'internal scratch']
  #allocation2 [shape = 'f32[8,1]{1,0:T(8,128)}', space=vmem, size = 0x1000, scoped, tag = 'scratch operand']
  #allocation3 [shape = 'f32[8,1]{1,0:T(8,128)}', space=vmem, size = 0x1000, scoped, tag = 'scratch operand']
  %s0 = inlined_call_operand.hbm [shape: bf16[16,128], index: 0, kind: input, shape index: {}]
  %s1 = inlined_call_operand.hbm [shape: bf16[16,128], index: 1, kind: input, shape index: {}]
  %s2 = inlined_call_operand.vmem [shape: f32[16,1], index: 2, kind: output, shape index: {}]
  %s3 = sld [smem:[#allocation0]]
  $region65: #{tpu_custom_call.1} parent=0
    _
  %s5 = ssub.s32 1, %s3
  %s6 = scalar_select 0, %s5, %s3
  $region1: #{tpu_custom_call.1} parent=0
    #allocation4 [shape = 'u8[4096]{0}', space=vmem, size = 0x1000, scoped, tag = 'input window, operand 0']
    #allocation5 [shape = 's32[2]{0}', space=sflag, size = 0x8, scoped, tag = 'scoped memory for tpu_custom_call.1']
    #allocation6 [shape = 'u8[4096]{0}', space=vmem, size = 0x1000, scoped, tag = 'input window, operand 1']
    #allocation7 [shape = 's32[2]{0}', space=sflag, size = 0x8, scoped, tag = 'scoped memory for tpu_custom_call.1']
    %7 = vsyncpa [#allocation5], 0
    %s8 = scalar_lea.sflag [#allocation5], 1
    %9 = vsyncpa %s8, 0
    %10 = vsyncpa [#allocation7], 0
    %s11 = scalar_lea.sflag [#allocation7], 1
    %12 = vsyncpa %s11, 0
    loop: start=0, step=1, limit=6
    $region2: #{tpu_custom_call.1} parent=1 // loop_pre_header
      _
    $region3: #{tpu_custom_call.1} parent=1 // loop_header
      %s14 = sphi 0, %s18
      %p15 = scmp.ge.s32.totalorder %s14, 6
      %s21 = sphi 0, %s33
      %s22 = sphi 0, %s29
      %s23 = sphi 0, %s21
      %s24 = sphi 0, %s22
      %s25 = sphi 0, %s23
      %s26 = sphi 0, %s24
      %s36 = sphi 0, %s38
      %s39 = sphi 0, %s36
      %s40 = sphi 0, %s39
      %s56 = sphi 0, %s40
      %s62 = sphi 0, %s64
      %s65 = sphi 0, %s62
      %s66 = sphi 0, %s65
      %s82 = sphi 0, %s66
      %s88 = sphi 0, %s90
      %s91 = sphi 0, %s88
      %s92 = sphi 0, %s91
      %s108 = sphi 0, %s92
    $region4: #{tpu_custom_call.1} parent=1 // loop_header_branch
      %17 = sbr.rel (%p15) target = $region8
    $region5: #{tpu_custom_call.1} parent=1 // loop_body
      %s19 = ssub.s32 %s14, 1
      %s20 = ssub.s32 %s14, 2
      %s27 = sadd.s32 1, %s22
      %p28 = scmp.ge.s32.totalorder %s27, 2
      %s29 = scalar_select %p28, 0, %s27
      %s30 = sadd.s32 1, %s21
      %s31 = scalar_select %p28, %s30, %s21
      %p32 = scmp.ge.s32.totalorder %s31, 2
      %s33 = scalar_select %p32, 0, %s31
      %s34 = ssub.s32 %s21, %s33
      %p35 = scmp.eq.s32.totalorder %s34, 0
      %s37 = sadd.s32 %s36, 1
      %s38 = scalar_select %p35, %s36, %s37
      %p41 = pneg %p35
      %p42 = scmp.eq.s32.totalorder %s14, 3
      %p43 = por %p41, %p42
      %p44 = scmp.ne.s32.totalorder %s36, %s39
      %p45 = scmp.eq.s32.totalorder %s14, 0
      %p46 = por %p44, %p45
      %p47 = scmp.ne.s32.totalorder %s36, %s39
      %p48 = scmp.eq.s32.totalorder %s19, 3
      %p49 = por %p47, %p48
      %p50 = scmp.ne.s32.totalorder %s39, %s40
      %p51 = scmp.eq.s32.totalorder %s19, 0
      %p52 = por %p50, %p51
      %p53 = scmp.ne.s32.totalorder %s39, %s40
      %p54 = scmp.eq.s32.totalorder %s20, 3
      %p55 = por %p53, %p54
      %p57 = scmp.ne.s32.totalorder %s40, %s56
      %p58 = scmp.eq.s32.totalorder %s20, 0
      %p59 = por %p57, %p58
      %s60 = ssub.s32 %s22, %s29
      %p61 = scmp.eq.s32.totalorder %s60, 0
      %s63 = sadd.s32 %s62, 1
      %s64 = scalar_select %p61, %s62, %s63
      %p67 = pneg %p61
      %p68 = scmp.eq.s32.totalorder %s14, 3
      %p69 = por %p67, %p68
      %p70 = scmp.ne.s32.totalorder %s62, %s65
      %p71 = scmp.eq.s32.totalorder %s14, 0
      %p72 = por %p70, %p71
      %p73 = scmp.ne.s32.totalorder %s62, %s65
      %p74 = scmp.eq.s32.totalorder %s19, 3
      %p75 = por %p73, %p74
      %p76 = scmp.ne.s32.totalorder %s65, %s66
      %p77 = scmp.eq.s32.totalorder %s19, 0
      %p78 = por %p76, %p77
      %p79 = scmp.ne.s32.totalorder %s65, %s66
      %p80 = scmp.eq.s32.totalorder %s20, 3
      %p81 = por %p79, %p80
      %p83 = scmp.ne.s32.totalorder %s66, %s82
      %p84 = scmp.eq.s32.totalorder %s20, 0
      %p85 = por %p83, %p84
      %s86 = ssub.s32 %s21, %s33
      %p87 = scmp.eq.s32.totalorder %s86, 0
      %s89 = sadd.s32 %s88, 1
      %s90 = scalar_select %p87, %s88, %s89
      %p93 = pneg %p87
      %p94 = scmp.eq.s32.totalorder %s14, 3
      %p95 = por %p93, %p94
      %p96 = scmp.ne.s32.totalorder %s88, %s91
      %p97 = scmp.eq.s32.totalorder %s14, 0
      %p98 = por %p96, %p97
      %p99 = scmp.ne.s32.totalorder %s88, %s91
      %p100 = scmp.eq.s32.totalorder %s19, 3
      %p101 = por %p99, %p100
      %p102 = scmp.ne.s32.totalorder %s91, %s92
      %p103 = scmp.eq.s32.totalorder %s19, 0
      %p104 = por %p102, %p103
      %p105 = scmp.ne.s32.totalorder %s91, %s92
      %p106 = scmp.eq.s32.totalorder %s20, 3
      %p107 = por %p105, %p106
      %p109 = scmp.ne.s32.totalorder %s92, %s108
      %p110 = scmp.eq.s32.totalorder %s20, 0
      %p111 = por %p109, %p110
      %p112 = scmp.le.s32.totalorder 1, %s14
      %p113 = scmp.lt.s32.totalorder %s14, 5
      %p114 = pnand %p112, %p113
      %p115 = pneg %p114
      // Predicated region
      $region9: #{tpu_custom_call.1} parent=5 // pred_check
        _
      $region10: #{tpu_custom_call.1} parent=5 // pred_check_branch
        %117 = sbr.rel (%p114) target = $region12
      $region11: #{tpu_custom_call.1} parent=5 // pred_region
        %s118 = ssub.s32 %s14, 1
      $region12: #{tpu_custom_call.1} parent=5 // pred_fallthru
        _
      %p119 = scmp.lt.s32.totalorder %s14, 4
      // Predicated region
      $region13: #{tpu_custom_call.1} parent=5 // pred_check
        %p120 = pneg %p119
      $region14: #{tpu_custom_call.1} parent=5 // pred_check_branch
        %122 = sbr.rel (%p120) target = $region16
      $region15: #{tpu_custom_call.1} parent=5 // pred_region
        // Predicated region
        $region17: #{tpu_custom_call.1} parent=15 // pred_check
          %p123 = pneg %p46
        $region18: #{tpu_custom_call.1} parent=15 // pred_check_branch
          %125 = sbr.rel (%p123) target = $region20
        $region19: #{tpu_custom_call.1} parent=15 // pred_region
          %s126 = sand.u32 %s36, 1
          %s127 = scalar_lea.sflag [#allocation5], %s126
          %s128 = sand.u32 %s36, 1
          %s129 = smul.addr %s128, 4
          %s130 = scalar_lea.vmem [#allocation4], %s129
          %s132 = ssub.s32 64, 64
          %133 = vsyncadd %s127, %s132
          %s134 = smul.addr %s21, 64
          %s135 = scalar_lea.hbm %s0, %s134
          %s137 = sshll.u32 %s130, 4
          %s138 = int_to_ptr.vmem [resolvable:$true] %s137
          %140 = dma.hbm_to_vmem [thread:$0]  %s135, 64, %s138, %s127
        $region20: #{tpu_custom_call.1} parent=15 // pred_fallthru
          _
        // Predicated region
        $region21: #{tpu_custom_call.1} parent=15 // pred_check
          %p141 = pneg %p72
        $region22: #{tpu_custom_call.1} parent=15 // pred_check_branch
          %143 = sbr.rel (%p141) target = $region24
        $region23: #{tpu_custom_call.1} parent=15 // pred_region
          %s144 = sand.u32 %s62, 1
          %s145 = scalar_lea.sflag [#allocation7], %s144
          %s146 = sand.u32 %s62, 1
          %s147 = smul.addr %s146, 4
          %s148 = scalar_lea.vmem [#allocation6], %s147
          %s150 = ssub.s32 64, 64
          %151 = vsyncadd %s145, %s150
          %s152 = smul.addr %s22, 64
          %s153 = scalar_lea.hbm %s1, %s152
          %s155 = sshll.u32 %s148, 4
          %s156 = int_to_ptr.vmem [resolvable:$true] %s155
          %158 = dma.hbm_to_vmem [thread:$0]  %s153, 64, %s156, %s145
        $region24: #{tpu_custom_call.1} parent=15 // pred_fallthru
          _
      $region16: #{tpu_custom_call.1} parent=5 // pred_fallthru
        _
      %p159 = scmp.le.s32.totalorder 1, %s14
      %p160 = scmp.lt.s32.totalorder %s14, 5
      %p161 = pnand %p159, %p160
      %p162 = pneg %p161
      // Predicated region
      $region25: #{tpu_custom_call.1} parent=5 // pred_check
        _
      $region26: #{tpu_custom_call.1} parent=5 // pred_check_branch
        %164 = sbr.rel (%p161) target = $region28
      $region27: #{tpu_custom_call.1} parent=5 // pred_region
        %s165 = ssub.s32 %s14, 1
        %s166 = sand.u32 %s39, 1
        %s167 = scalar_lea.sflag [#allocation5], %s166
        %s168 = sand.u32 %s39, 1
        %s169 = smul.addr %s168, 4
        %s170 = scalar_lea.vmem [#allocation4], %s169
        // Predicated region
        $region29: #{tpu_custom_call.1} parent=27 // pred_check
          %p171 = pneg %p52
        $region30: #{tpu_custom_call.1} parent=27 // pred_check_branch
          %173 = sbr.rel (%p171) target = $region32
        $region31: #{tpu_custom_call.1} parent=27 // pred_region
          %174 = dma.done %s167, 64
        $region32: #{tpu_custom_call.1} parent=27 // pred_fallthru
          _
        %s175 = sand.u32 %s65, 1
        %s176 = scalar_lea.sflag [#allocation7], %s175
        %s177 = sand.u32 %s65, 1
        %s178 = smul.addr %s177, 4
        %s179 = scalar_lea.vmem [#allocation6], %s178
        // Predicated region
        $region33: #{tpu_custom_call.1} parent=27 // pred_check
          %p180 = pneg %p78
        $region34: #{tpu_custom_call.1} parent=27 // pred_check_branch
          %182 = sbr.rel (%p180) target = $region36
        $region35: #{tpu_custom_call.1} parent=27 // pred_region
          %183 = dma.done %s176, 64
        $region36: #{tpu_custom_call.1} parent=27 // pred_fallthru
          _
        %s184 = sand.u32 %s39, 1
        %s185 = scalar_lea.sflag [#allocation5], %s184
        %s186 = sand.u32 %s39, 1
        %s187 = smul.addr %s186, 4
        %s188 = scalar_lea.vmem [#allocation4], %s187
        %p189 = pneg %p52
        %p190 = pneg %p49
        %s191 = sand.u32 %s65, 1
        %s192 = scalar_lea.sflag [#allocation7], %s191
        %s193 = sand.u32 %s65, 1
        %s194 = smul.addr %s193, 4
        %s195 = scalar_lea.vmem [#allocation6], %s194
        %p196 = pneg %p78
        %p197 = pneg %p75
        %p198 = pneg %p104
        %p199 = pneg %p101
        %p200 = scmp.lt.s32.totalorder %s23, 1
        %s201 = scalar_select %p200, %s23, 1
        %s202 = smul.addr %s201, 8
        %s203 = scalar_lea.vmem %s2, %s202
        %p204 = scmp.lt.s32.totalorder %s23, 1
        %s205 = scalar_select %p204, %s23, 1
        %s206 = smul.addr %s205, 8
        %s207 = scalar_lea.vmem %s2, %s206
        %p209 = scmp.eq.s32.totalorder %s24, 0
        // Predicated region
        $region37: #{tpu_custom_call.1} parent=27 // pred_check
          %p210 = pneg %p209
        $region38: #{tpu_custom_call.1} parent=27 // pred_check_branch
          %212 = sbr.rel (%p210) target = $region40
        $region39: #{tpu_custom_call.1} parent=27 // pred_region
          %vm213 = vcmask 7168
          %214 = vst.msk [vmem:[#allocation2] sm:$0xff] %vm213, -1e+30
          %215 = vst.msk [vmem:[#allocation3] sm:$0xff] %vm213, 0.0
        $region40: #{tpu_custom_call.1} parent=27 // pred_fallthru
          _
        %v216 = vld [vmem:[%s170] sm:$0xf]
        %v217 = vld [vmem:[%s179] sm:$0xf]
        %218 = vmatprep.subr.bf16.mxu0 0
        %219 = vmatpush1.bf16.xpose.msra.mxu0 %v217
        %220 = vmatprep.subr.bf16.mxu0 0
        %221 = vmatpush1.bf16.xpose.msra.mxu0 0
        %222 = vmatprep.subr.bf16.mxu0 0
        %223 = vmatpush1.bf16.xpose.msra.mxu0 0
        %224 = vmatprep.subr.bf16.mxu0 0
        %225 = vmatpush1.bf16.xpose.msra.mxu0 0
        %226 = vmatprep.subr.bf16.mxu0 0
        %227 = vmatpush1.bf16.xpose.msra.mxu0 0
        %228 = vmatprep.subr.bf16.mxu0 0
        %229 = vmatpush1.bf16.xpose.msra.mxu0 0
        %230 = vmatprep.subr.bf16.mxu0 0
        %231 = vmatpush1.bf16.xpose.msra.mxu0 0
        %232 = vmatprep.subr.bf16.mxu0 0
        %233 = vmatpush1.bf16.xpose.msra.mxu0 0
        %234 = vmatprep.subr.bf16.mxu0 0
        %235 = vmatpush1.bf16.xpose.msra.mxu0 0
        %236 = vmatprep.subr.bf16.mxu0 0
        %237 = vmatpush1.bf16.xpose.msra.mxu0 0
        %238 = vmatprep.subr.bf16.mxu0 0
        %239 = vmatpush1.bf16.xpose.msra.mxu0 0
        %240 = vmatprep.subr.bf16.mxu0 0
        %241 = vmatpush1.bf16.xpose.msra.mxu0 0
        %242 = vmatprep.subr.bf16.mxu0 0
        %243 = vmatpush1.bf16.xpose.msra.mxu0 0
        %244 = vmatprep.subr.bf16.mxu0 0
        %245 = vmatpush1.bf16.xpose.msra.mxu0 0
        %246 = vmatprep.subr.bf16.mxu0 0
        %247 = vmatpush1.bf16.xpose.msra.mxu0 0
        %248 = vmatprep.subr.bf16.mxu0 0
        %249 = vmatpush1.bf16.xpose.msra.mxu0 0
        %250 = vmatprep.mubr.bf16.mxu0 0
        %251 = vmatmul.mubr.bf16.gmra.mrb[0].mxu0 %v216
        %v252 = vpop.f32.mrb[0].mxu0
        %v253 = vadd.f32 0.0, %v252
        %v254 = vpop.f32.mrb[0].mxu0
        %v255 = vpop.f32.mrb[0].mxu0
        %v256 = vpop.f32.mrb[0].mxu0
        %257 = vdwg.mxu0
        %s258 = smul.u32 %s23, 8
        %s259 = smul.u32 %s24, 8
        %p260 = scmp.le.s32.totalorder %s259, %s258
        %s261 = sadd.s32 %s259, 8
        %p262 = scmp.lt.s32.totalorder %s258, %s261
        %p263 = pnand %p260, %p262
        %p264 = pneg %p263
        // Predicated region
        $region41: #{tpu_custom_call.1} parent=27 // pred_check
          _
        $region42: #{tpu_custom_call.1} parent=27 // pred_check_branch
          %266 = sbr.rel (%p263) target = $region44
        $region43: #{tpu_custom_call.1} parent=27 // pred_region
          %v267 = vlaneseq
          %v268 = vand.u32 %v267, 127
          %v269 = vlaneseq
          %v270 = vshrl.u32 %v269, 7
          %s271 = ssub.s32 %s258, %s259
          %v272 = vstv %s271
          %v273 = vadd.s32 %v270, %v272
          %vm274 = vcmp.eq.s32.totalorder %v268, %v273
          %v275 = vsel %vm274, -1e+30, %v253
          %v276 = vld [vmem:[#allocation2] sm:$0xff]
          %vm277 = vcmask 64512
          %v278 = vsel %vm277, %v275, -inf
          %279 = vmax.xlane.f32.xlu0 %v278
          %v280 = vpop.xlane.xlu0 %279
          %v281 = vmax.f32 %v276, %v280
          %v282 = vsub.f32 %v276, %v281
          %v283 = vmul.f32 %v282, 1.442695
          %v284 = vpow.pop %v283
          %v285 = vld [vmem:[#allocation3] sm:$0xff]
          %v286 = vmul.f32 %v284, %v285
          %288 = vset.pattern.permute.xlu0 0
          %289 = vperm.xlu0 %288, %v281
          %v290 = vpop.permute.xlu0 %289
          %v292 = vsub.f32 %v275, %v290
          %v293 = vmul.f32 %v292, 1.442695
          %v294 = vpow.pop %v293
          %v295 = vsel %vm277, %v294, 0.0
          %296 = vadd.xlane.f32.xlu0 %v295
          %v297 = vpop.xlane.xlu0 %296
          %v298 = vadd.f32 %v286, %v297
          %vm299 = vcmask 7168
          %300 = vst.msk [vmem:[#allocation3] sm:$0xff] %vm299, %v298
          %301 = vst.msk [vmem:[#allocation2] sm:$0xff] %vm299, %v281
        $region44: #{tpu_custom_call.1} parent=27 // pred_fallthru
          _
        %p302 = pneg %p264
        // Predicated region
        $region45: #{tpu_custom_call.1} parent=27 // pred_check
          _
        $region46: #{tpu_custom_call.1} parent=27 // pred_check_branch
          %304 = sbr.rel (%p264) target = $region48
        $region47: #{tpu_custom_call.1} parent=27 // pred_region
          %v305 = vld [vmem:[#allocation2] sm:$0xff]
          %vm306 = vcmask 64512
          %v307 = vsel %vm306, %v253, -inf
          %308 = vmax.xlane.f32.xlu0 %v307
          %v309 = vpop.xlane.xlu0 %308
          %v310 = vmax.f32 %v305, %v309
          %v311 = vsub.f32 %v305, %v310
          %v312 = vmul.f32 %v311, 1.442695
          %v313 = vpow.pop %v312
          %v314 = vld [vmem:[#allocation3] sm:$0xff]
          %v315 = vmul.f32 %v313, %v314
          %317 = vset.pattern.permute.xlu0 0
          %318 = vperm.xlu0 %317, %v310
          %v319 = vpop.permute.xlu0 %318
          %v321 = vsub.f32 %v253, %v319
          %v322 = vmul.f32 %v321, 1.442695
          %v323 = vpow.pop %v322
          %v324 = vsel %vm306, %v323, 0.0
          %325 = vadd.xlane.f32.xlu0 %v324
          %v326 = vpop.xlane.xlu0 %325
          %v327 = vadd.f32 %v315, %v326
          %vm328 = vcmask 7168
          %329 = vst.msk [vmem:[#allocation3] sm:$0xff] %vm328, %v327
          %330 = vst.msk [vmem:[#allocation2] sm:$0xff] %vm328, %v310
        $region48: #{tpu_custom_call.1} parent=27 // pred_fallthru
          _
        %p331 = scmp.eq.s32.totalorder %s24, 1
        // Predicated region
        $region49: #{tpu_custom_call.1} parent=27 // pred_check
          %p332 = pneg %p331
        $region50: #{tpu_custom_call.1} parent=27 // pred_check_branch
          %334 = sbr.rel (%p332) target = $region52
        $region51: #{tpu_custom_call.1} parent=27 // pred_region
          %v335 = vld [vmem:[#allocation2] sm:$0xff]
          %v336 = vld [vmem:[#allocation3] sm:$0xff]
          %v337 = vlog2.pop %v336
          %v338 = vmul.f32 %v337, 0.6931472
          %v339 = vadd.f32 %v335, %v338
          %vm340 = vcmask 7168
          %341 = vst.msk [vmem:[%s207] sm:$0xff] %vm340, %v339
        $region52: #{tpu_custom_call.1} parent=27 // pred_fallthru
          _
        %p342 = scmp.lt.s32.totalorder %s23, 1
        %s343 = scalar_select %p342, %s23, 1
        %s344 = smul.addr %s343, 8
        %s345 = scalar_lea.vmem %s2, %s344
        // Predicated region
        $region53: #{tpu_custom_call.1} parent=27 // pred_check
          %p346 = pneg %p101
        $region54: #{tpu_custom_call.1} parent=27 // pred_check_branch
          %348 = sbr.rel (%p346) target = $region56
        $region55: #{tpu_custom_call.1} parent=27 // pred_region
          _
        $region56: #{tpu_custom_call.1} parent=27 // pred_fallthru
          _
      $region28: #{tpu_custom_call.1} parent=5 // pred_fallthru
        _
      %p349 = scmp.le.s32.totalorder 2, %s14
      // Predicated region
      $region57: #{tpu_custom_call.1} parent=5 // pred_check
        %p350 = pneg %p349
      $region58: #{tpu_custom_call.1} parent=5 // pred_check_branch
        %352 = sbr.rel (%p350) target = $region60
      $region59: #{tpu_custom_call.1} parent=5 // pred_region
        %s353 = ssub.s32 %s14, 2
        // Predicated region
        $region61: #{tpu_custom_call.1} parent=59 // pred_check
          %p354 = pneg %p107
        $region62: #{tpu_custom_call.1} parent=59 // pred_check_branch
          %356 = sbr.rel (%p354) target = $region64
        $region63: #{tpu_custom_call.1} parent=59 // pred_region
          %p357 = scmp.lt.s32.totalorder %s25, 1
          %s358 = scalar_select %p357, %s25, 1
          %s359 = smul.addr %s358, 8
          %s360 = scalar_lea.vmem %s2, %s359
        $region64: #{tpu_custom_call.1} parent=59 // pred_fallthru
          _
      $region60: #{tpu_custom_call.1} parent=5 // pred_fallthru
        _
    $region6: #{tpu_custom_call.1} parent=1 // loop_footer
      %s18 = sadd.s32 1, %s14
    $region7: #{tpu_custom_call.1} parent=1 // loop_footer_branch
      %13 = sbr.rel target = $region3
    $region8: #{tpu_custom_call.1} parent=1 // loop_exit
      _
    %361 = vsyncpa [#allocation5], 1
    %s362 = scalar_lea.sflag [#allocation5], 1
    %363 = vsyncpa %s362, 1
    %364 = vsyncpa [#allocation7], 1
    %s365 = scalar_lea.sflag [#allocation7], 1
    %366 = vsyncpa %s365, 1

</llo_original>
